<compile_context>
chip_gen: v6e
topology: v6e:2x2x1
jax: 0.10.0
libtpu: 0.0.40
codegen_flags: <defaults>
</compile_context>

<pallas_src>
import math
import numpy as np
import jax
import jax.numpy as jnp
from jax.experimental import pallas as pl
from jax.experimental.pallas import tpu as pltpu  # noqa: F401  (TPU target)

LANES = 128


def build_cnn_forward(params, *, batch, n_input, n_channels, n_output,
                      kernel_size=3):
    """Host-side one-time weight repacking; returns a jitted forward(x) built
    around a single fused Pallas kernel."""
    k = kernel_size
    w1, b1, w2, b2, wf, bf = [np.asarray(p, np.float32) for p in params]
    B, W, C = batch, n_input, n_channels
    C1, C2 = w1.shape[0], w2.shape[0]          # 10, 20
    Hc1 = W - k + 1                            # conv1 output side (14)
    Hp1 = Hc1 // 2                             # after 2x2 max-pool (7)
    Hc2 = Hp1 - k + 1                          # 5
    Hp2 = Hc2 // 2                             # 2
    HALF1 = LANES                              # conv1 lane half (i parity)
    HALF2 = LANES // 2                         # conv2 lane half (i2 parity)
    K2 = ((Hp1 * C1 + 7) // 8) * 8             # packed conv2 K rows (72)
    KF = ((Hp2 * C2 + 7) // 8) * 8             # packed fc K rows (40)

    assert W * C <= LANES, "input row (W*C) must fit in 128 lanes"
    assert Hp1 * C1 <= HALF1 and Hp2 * C2 <= HALF2
    assert wf.shape[1] == Hp2 * Hp2 * C2, (wf.shape, Hp2, C2)
    assert 2 * (Hp1 - 1) + 1 + (k - 1) < W      # conv1 h-index stays in range
    assert 2 * (Hp2 - 1) + 1 + (k - 1) < Hp1    # conv2 I-index stays in range

    # Dense row counts.  Rows that do not correspond to valid output positions
    # carry garbage that is provably never consumed downstream (all reads are
    # in-bounds by construction).
    NX = B * W                 # input rows     (row = b*W + w)
    N1 = NX - (k - 1)          # conv1 rows     (row = b*W + j)
    NQ = N1 - 1                # after j-pool shift-max
    N2 = NQ - 2 * (k - 1)      # conv2 rows     (row = b*W + 2*j2)
    NY2 = N2 - 2               # after j2-pool shift-max
    assert (B - 1) * W + (Hc1 - 1) < N1
    assert (B - 1) * W + 2 * (2 * (Hp2 - 1) + 1) < N2
    assert (B - 1) * W + 4 * (Hp2 - 1) < NY2

    # conv1 weights: (k, W*C, 2*HALF1).  Row = h*C + c of the input line,
    # lane = di*HALF1 + I*C1 + m with i = 2*I + di (pool parity in the lane
    # half).  w1w[s, h*C+c, ...] = w1[m, c, r=h-(2I+di), s].
    w1w = np.zeros((k, W * C, 2 * HALF1), np.float32)
    for s in range(k):
        for r in range(k):
            for I in range(Hp1):
                for di in range(2):
                    h0 = 2 * I + di + r
                    for c in range(C):
                        w1w[s, h0 * C + c,
                            di * HALF1 + I * C1:di * HALF1 + I * C1 + C1] = \
                            w1[:, c, r, s]
    b1w = np.zeros((1, HALF1), np.float32)
    for I in range(Hp1):
        b1w[0, I * C1:I * C1 + C1] = b1

    # conv2 weights: (k, K2, 2*HALF2).  Row = If*C1 + m of the pooled conv1
    # line, lane = d2i*HALF2 + I2*C2 + n with i2 = 2*I2 + d2i.
    w2w = np.zeros((k, K2, 2 * HALF2), np.float32)
    for s2 in range(k):
        for r2 in range(k):
            for I2 in range(Hp2):
                for d2i in range(2):
                    If = 2 * I2 + d2i + r2
                    for m in range(C1):
                        w2w[s2, If * C1 + m,
                            d2i * HALF2 + I2 * C2:d2i * HALF2 + I2 * C2 + C2] = \
                            w2[:, m, r2, s2]
    b2w = np.zeros((1, HALF2), np.float32)
    for I2 in range(Hp2):
        b2w[0, I2 * C2:I2 * C2 + C2] = b2

    # fc1 weights: (Hp2, KF, 128), one block per pooled-J position, pre-
    # permuted so the (I2, n)-in-lanes features feed it directly (PyTorch
    # flatten order is n*Hp2*Hp2 + I2*Hp2 + J2).
    wfw = np.zeros((Hp2, KF, LANES), np.float32)
    for J2 in range(Hp2):
        for I2 in range(Hp2):
            for n in range(C2):
                wfw[J2, I2 * C2 + n, :n_output] = \
                    wf[:, n * (Hp2 * Hp2) + I2 * Hp2 + J2]
    bfw = np.zeros((1, LANES), np.float32)
    bfw[0, :n_output] = bf

    def fused_kernel(x_ref, w1_ref, b1_ref, w2_ref, b2_ref, wf_ref, bf_ref,
                     o_ref):
        x = x_ref[...]                                       # (NX, W*C) f32
        # ---- conv1: accumulate over the kernel's j-offset s (row shift 1).
        y1 = jnp.dot(x[0:N1], w1_ref[0], preferred_element_type=jnp.float32)
        for s in range(1, k):
            y1 = y1 + jnp.dot(x[s:s + N1], w1_ref[s],
                              preferred_element_type=jnp.float32)
        # 2x2 max-pool + bias + relu: i-pairs sit in the two 128-lane halves
        # (free vreg-aligned split), j-pairs are adjacent rows (shift-max).
        p1 = jnp.maximum(y1[:, :HALF1], y1[:, HALF1:])       # (N1, HALF1)
        q = jnp.maximum(p1[0:NQ], p1[1:NQ + 1])              # (NQ, HALF1)
        q = jnp.maximum(q + b1_ref[...], 0.0)

        # ---- conv2: accumulate over s2 (row shifts of 2); i2 in lanes.
        z = jnp.dot(q[0:N2, :K2], w2_ref[0],
                    preferred_element_type=jnp.float32)
        for s2 in range(1, k):
            z = z + jnp.dot(q[2 * s2:2 * s2 + N2, :K2], w2_ref[s2],
                            preferred_element_type=jnp.float32)
        r2p = jnp.maximum(z[:, :HALF2], z[:, HALF2:])        # (N2, HALF2)
        y2 = jnp.maximum(r2p[0:NY2], r2p[2:NY2 + 2])         # (NY2, HALF2)
        y2 = jnp.maximum(y2 + b2_ref[...], 0.0)

        # ---- fc1: accumulate over the Hp2 pooled-J positions; one (B, KF)
        # left operand per position (no scratch, no wide concat).
        o = None
        for J2 in range(Hp2):
            lhs = jnp.concatenate(
                [y2[b * W + 4 * J2:b * W + 4 * J2 + 1, :KF] for b in range(B)],
                axis=0)                                      # (B, KF)
            t = jnp.dot(lhs, wf_ref[J2], preferred_element_type=jnp.float32)
            o = t if o is None else o + t
        o_ref[...] = jnp.maximum(o + bf_ref[...], 0.0)       # (B, 128)

    fused = pl.pallas_call(
        fused_kernel,
        out_shape=jax.ShapeDtypeStruct((B, LANES), jnp.float32),
    )

    w1w, b1w, w2w, b2w, wfw, bfw = map(
        jnp.asarray, (w1w, b1w, w2w, b2w, wfw, bfw))

    def forward(x):
        # PyTorch does x.transpose(1, 3); that transpose is absorbed into the
        # packed weights, so the input only needs a free row-major reshape.
        x2 = x.reshape(B * W, W * C).astype(jnp.float32)     # (B*W, W*C)
        out = fused(x2, w1w, b1w, w2w, b2w, wfw, bfw)
        return out[:, :n_output]

    return jax.jit(forward)


def cnn_reference(x, params, kernel_size=3):
    """Pure-JAX reference mirroring the PyTorch forward (NCHW)."""
    w1, b1, w2, b2, wf, bf = params
    xt = jnp.transpose(x, (0, 3, 2, 1)).astype(jnp.float32)  # x.transpose(1, 3)

    def conv(z, w, b):
        y = jax.lax.conv_general_dilated(
            z, w, (1, 1), 'VALID',
            dimension_numbers=('NCHW', 'OIHW', 'NCHW'),
            precision=jax.lax.Precision.HIGHEST)
        return y + b[None, :, None, None]

    def maxpool2(z):
        Bz, Cz, H, Wd = z.shape
        Hp, Wp = H // 2, Wd // 2
        return z[:, :, :2 * Hp, :2 * Wp].reshape(
            Bz, Cz, Hp, 2, Wp, 2).max(axis=(3, 5))

    y = jax.nn.relu(maxpool2(conv(xt, w1, b1)))
    y = jax.nn.relu(maxpool2(conv(y, w2, b2)))
    y = y.reshape(y.shape[0], -1)
    return jax.nn.relu(
        jnp.dot(y, wf.T, precision=jax.lax.Precision.HIGHEST) + bf)


if __name__ == "__main__":
    # Small shapes consistent with the module: n_input=16, n_channels=4,
    # n_output=32, kernel_size=3 -> lin_size=2, fc in-features = 2*2*20 = 80.
    B, n_input, n_channels, n_output, k = 2, 16, 4, 32, 3
    lin_size = math.floor(
        (math.floor((n_input - (k - 1)) / 2) - (k - 1)) / 2)

    key = jax.random.PRNGKey(0)
    ks = jax.random.split(key, 7)

    def u(kk, shape, fan_in):
        bound = 1.0 / math.sqrt(fan_in)
        return jax.random.uniform(kk, shape, jnp.float32, -bound, bound)

    w1 = u(ks[0], (10, n_channels, k, k), n_channels * k * k)
    b1 = u(ks[1], (10,), n_channels * k * k)
    w2 = u(ks[2], (20, 10, k, k), 10 * k * k)
    b2 = u(ks[3], (20,), 10 * k * k)
    wf = u(ks[4], (n_output, lin_size * lin_size * 20),
           lin_size * lin_size * 20)
    bf = u(ks[5], (n_output,), lin_size * lin_size * 20)
    params = (w1, b1, w2, b2, wf, bf)

    # The module's forward expects x as (B, W, H, C).
    x = jax.random.normal(ks[6], (B, n_input, n_input, n_channels),
                          jnp.float32)

    forward = build_cnn_forward(params, batch=B, n_input=n_input,
                                n_channels=n_channels, n_output=n_output,
                                kernel_size=k)
    out = jax.block_until_ready(forward(x))
    ref = jax.block_until_ready(cnn_reference(x, params, k))
    assert out.shape == (B, n_output), out.shape
    np.testing.assert_allclose(np.asarray(out), np.asarray(ref),
                               rtol=2e-3, atol=2e-3)
    print("KERNEL_OK")
</pallas_src>

<mosaic_0001>
module attributes {stable_mosaic.version = 11 : i64} {
  func.func @fused_kernel(%arg0: memref<32x64xf32, #tpu.memory_space<vmem>>, %arg1: memref<3x64x256xf32, #tpu.memory_space<vmem>>, %arg2: memref<1x128xf32, #tpu.memory_space<vmem>>, %arg3: memref<3x72x128xf32, #tpu.memory_space<vmem>>, %arg4: memref<1x64xf32, #tpu.memory_space<vmem>>, %arg5: memref<2x40x128xf32, #tpu.memory_space<vmem>>, %arg6: memref<1x128xf32, #tpu.memory_space<vmem>>, %arg7: memref<2x128xf32, #tpu.memory_space<vmem>>) attributes {dimension_semantics = [], scalar_prefetch = 0 : i64, scratch_operands = 0 : i64, tpu.core_type = #tpu.core_type<tc>} {
    %c0 = arith.constant 0 : index
    %c0_0 = arith.constant 0 : index
    %0 = vector.load %arg0[%c0, %c0_0] : memref<32x64xf32, #tpu.memory_space<vmem>>, vector<32x64xf32>
    %1 = vector.extract_strided_slice %0 {offsets = [0, 0], sizes = [30, 64], strides = [1, 1]} : vector<32x64xf32> to vector<30x64xf32>
    %c0_1 = arith.constant 0 : index
    %c0_2 = arith.constant 0 : index
    %c0_3 = arith.constant 0 : index
    %2 = vector.load %arg1[%c0_1, %c0_2, %c0_3] : memref<3x64x256xf32, #tpu.memory_space<vmem>>, vector<1x64x256xf32>
    %3 = vector.shape_cast %2 : vector<1x64x256xf32> to vector<64x256xf32>
    %cst = arith.constant dense<0.000000e+00> : vector<30x256xf32>
    %4 = tpu.matmul %1, %3, %cst {dimension_numbers = #tpu.dot_dimension_numbers<[1], [0], [0], [1], [0, 0, 1, 1], [], []>} : vector<30x64xf32>, vector<64x256xf32>, vector<30x256xf32> -> vector<30x256xf32>
    %5 = vector.extract_strided_slice %0 {offsets = [1, 0], sizes = [30, 64], strides = [1, 1]} : vector<32x64xf32> to vector<30x64xf32>
    %c1 = arith.constant 1 : index
    %c0_4 = arith.constant 0 : index
    %c0_5 = arith.constant 0 : index
    %6 = vector.load %arg1[%c1, %c0_4, %c0_5] : memref<3x64x256xf32, #tpu.memory_space<vmem>>, vector<1x64x256xf32>
    %7 = vector.shape_cast %6 : vector<1x64x256xf32> to vector<64x256xf32>
    %cst_6 = arith.constant dense<0.000000e+00> : vector<30x256xf32>
    %8 = tpu.matmul %5, %7, %cst_6 {dimension_numbers = #tpu.dot_dimension_numbers<[1], [0], [0], [1], [0, 0, 1, 1], [], []>} : vector<30x64xf32>, vector<64x256xf32>, vector<30x256xf32> -> vector<30x256xf32>
    %9 = arith.addf %4, %8 : vector<30x256xf32>
    %10 = vector.extract_strided_slice %0 {offsets = [2, 0], sizes = [30, 64], strides = [1, 1]} : vector<32x64xf32> to vector<30x64xf32>
    %c2 = arith.constant 2 : index
    %c0_7 = arith.constant 0 : index
    %c0_8 = arith.constant 0 : index
    %11 = vector.load %arg1[%c2, %c0_7, %c0_8] : memref<3x64x256xf32, #tpu.memory_space<vmem>>, vector<1x64x256xf32>
    %12 = vector.shape_cast %11 : vector<1x64x256xf32> to vector<64x256xf32>
    %cst_9 = arith.constant dense<0.000000e+00> : vector<30x256xf32>
    %13 = tpu.matmul %10, %12, %cst_9 {dimension_numbers = #tpu.dot_dimension_numbers<[1], [0], [0], [1], [0, 0, 1, 1], [], []>} : vector<30x64xf32>, vector<64x256xf32>, vector<30x256xf32> -> vector<30x256xf32>
    %14 = arith.addf %9, %13 : vector<30x256xf32>
    %15 = vector.extract_strided_slice %14 {offsets = [0, 0], sizes = [30, 128], strides = [1, 1]} : vector<30x256xf32> to vector<30x128xf32>
    %16 = vector.extract_strided_slice %14 {offsets = [0, 128], sizes = [30, 128], strides = [1, 1]} : vector<30x256xf32> to vector<30x128xf32>
    %17 = arith.maximumf %15, %16 : vector<30x128xf32>
    %18 = vector.extract_strided_slice %17 {offsets = [0, 0], sizes = [29, 128], strides = [1, 1]} : vector<30x128xf32> to vector<29x128xf32>
    %19 = vector.extract_strided_slice %17 {offsets = [1, 0], sizes = [29, 128], strides = [1, 1]} : vector<30x128xf32> to vector<29x128xf32>
    %20 = arith.maximumf %18, %19 : vector<29x128xf32>
    %c0_10 = arith.constant 0 : index
    %c0_11 = arith.constant 0 : index
    %21 = vector.load %arg2[%c0_10, %c0_11] : memref<1x128xf32, #tpu.memory_space<vmem>>, vector<1x128xf32>
    %22 = vector.broadcast %21 : vector<1x128xf32> to vector<29x128xf32>
    %23 = arith.addf %20, %22 : vector<29x128xf32>
    %cst_12 = arith.constant 0.000000e+00 : f32
    %24 = vector.broadcast %cst_12 : f32 to vector<29x128xf32>
    %25 = arith.maximumf %23, %24 : vector<29x128xf32>
    %26 = vector.extract_strided_slice %25 {offsets = [0, 0], sizes = [25, 72], strides = [1, 1]} : vector<29x128xf32> to vector<25x72xf32>
    %c0_13 = arith.constant 0 : index
    %c0_14 = arith.constant 0 : index
    %c0_15 = arith.constant 0 : index
    %27 = vector.load %arg3[%c0_13, %c0_14, %c0_15] : memref<3x72x128xf32, #tpu.memory_space<vmem>>, vector<1x72x128xf32>
    %28 = vector.shape_cast %27 : vector<1x72x128xf32> to vector<72x128xf32>
    %cst_16 = arith.constant dense<0.000000e+00> : vector<25x128xf32>
    %29 = tpu.matmul %26, %28, %cst_16 {dimension_numbers = #tpu.dot_dimension_numbers<[1], [0], [0], [1], [0, 0, 1, 1], [], []>} : vector<25x72xf32>, vector<72x128xf32>, vector<25x128xf32> -> vector<25x128xf32>
    %30 = vector.extract_strided_slice %25 {offsets = [2, 0], sizes = [25, 72], strides = [1, 1]} : vector<29x128xf32> to vector<25x72xf32>
    %c1_17 = arith.constant 1 : index
    %c0_18 = arith.constant 0 : index
    %c0_19 = arith.constant 0 : index
    %31 = vector.load %arg3[%c1_17, %c0_18, %c0_19] : memref<3x72x128xf32, #tpu.memory_space<vmem>>, vector<1x72x128xf32>
    %32 = vector.shape_cast %31 : vector<1x72x128xf32> to vector<72x128xf32>
    %cst_20 = arith.constant dense<0.000000e+00> : vector<25x128xf32>
    %33 = tpu.matmul %30, %32, %cst_20 {dimension_numbers = #tpu.dot_dimension_numbers<[1], [0], [0], [1], [0, 0, 1, 1], [], []>} : vector<25x72xf32>, vector<72x128xf32>, vector<25x128xf32> -> vector<25x128xf32>
    %34 = arith.addf %29, %33 : vector<25x128xf32>
    %35 = vector.extract_strided_slice %25 {offsets = [4, 0], sizes = [25, 72], strides = [1, 1]} : vector<29x128xf32> to vector<25x72xf32>
    %c2_21 = arith.constant 2 : index
    %c0_22 = arith.constant 0 : index
    %c0_23 = arith.constant 0 : index
    %36 = vector.load %arg3[%c2_21, %c0_22, %c0_23] : memref<3x72x128xf32, #tpu.memory_space<vmem>>, vector<1x72x128xf32>
    %37 = vector.shape_cast %36 : vector<1x72x128xf32> to vector<72x128xf32>
    %cst_24 = arith.constant dense<0.000000e+00> : vector<25x128xf32>
    %38 = tpu.matmul %35, %37, %cst_24 {dimension_numbers = #tpu.dot_dimension_numbers<[1], [0], [0], [1], [0, 0, 1, 1], [], []>} : vector<25x72xf32>, vector<72x128xf32>, vector<25x128xf32> -> vector<25x128xf32>
    %39 = arith.addf %34, %38 : vector<25x128xf32>
    %40 = vector.extract_strided_slice %39 {offsets = [0, 0], sizes = [25, 64], strides = [1, 1]} : vector<25x128xf32> to vector<25x64xf32>
    %41 = vector.extract_strided_slice %39 {offsets = [0, 64], sizes = [25, 64], strides = [1, 1]} : vector<25x128xf32> to vector<25x64xf32>
    %42 = arith.maximumf %40, %41 : vector<25x64xf32>
    %43 = vector.extract_strided_slice %42 {offsets = [0, 0], sizes = [23, 64], strides = [1, 1]} : vector<25x64xf32> to vector<23x64xf32>
    %44 = vector.extract_strided_slice %42 {offsets = [2, 0], sizes = [23, 64], strides = [1, 1]} : vector<25x64xf32> to vector<23x64xf32>
    %45 = arith.maximumf %43, %44 : vector<23x64xf32>
    %c0_25 = arith.constant 0 : index
    %c0_26 = arith.constant 0 : index
    %46 = vector.load %arg4[%c0_25, %c0_26] : memref<1x64xf32, #tpu.memory_space<vmem>>, vector<1x64xf32>
    %47 = vector.broadcast %46 : vector<1x64xf32> to vector<23x64xf32>
    %48 = arith.addf %45, %47 : vector<23x64xf32>
    %cst_27 = arith.constant 0.000000e+00 : f32
    %49 = vector.broadcast %cst_27 : f32 to vector<23x64xf32>
    %50 = arith.maximumf %48, %49 : vector<23x64xf32>
    %51 = vector.extract_strided_slice %50 {offsets = [0, 0], sizes = [1, 40], strides = [1, 1]} : vector<23x64xf32> to vector<1x40xf32>
    %52 = vector.extract_strided_slice %50 {offsets = [16, 0], sizes = [1, 40], strides = [1, 1]} : vector<23x64xf32> to vector<1x40xf32>
    %53 = tpu.concatenate %51, %52 in 0 : vector<1x40xf32>, vector<1x40xf32> -> vector<2x40xf32>
    %c0_28 = arith.constant 0 : index
    %c0_29 = arith.constant 0 : index
    %c0_30 = arith.constant 0 : index
    %54 = vector.load %arg5[%c0_28, %c0_29, %c0_30] : memref<2x40x128xf32, #tpu.memory_space<vmem>>, vector<1x40x128xf32>
    %55 = vector.shape_cast %54 : vector<1x40x128xf32> to vector<40x128xf32>
    %cst_31 = arith.constant dense<0.000000e+00> : vector<2x128xf32>
    %56 = tpu.matmul %53, %55, %cst_31 {dimension_numbers = #tpu.dot_dimension_numbers<[1], [0], [0], [1], [0, 0, 1, 1], [], []>} : vector<2x40xf32>, vector<40x128xf32>, vector<2x128xf32> -> vector<2x128xf32>
    %57 = vector.extract_strided_slice %50 {offsets = [4, 0], sizes = [1, 40], strides = [1, 1]} : vector<23x64xf32> to vector<1x40xf32>
    %58 = vector.extract_strided_slice %50 {offsets = [20, 0], sizes = [1, 40], strides = [1, 1]} : vector<23x64xf32> to vector<1x40xf32>
    %59 = tpu.concatenate %57, %58 in 0 : vector<1x40xf32>, vector<1x40xf32> -> vector<2x40xf32>
    %c1_32 = arith.constant 1 : index
    %c0_33 = arith.constant 0 : index
    %c0_34 = arith.constant 0 : index
    %60 = vector.load %arg5[%c1_32, %c0_33, %c0_34] : memref<2x40x128xf32, #tpu.memory_space<vmem>>, vector<1x40x128xf32>
    %61 = vector.shape_cast %60 : vector<1x40x128xf32> to vector<40x128xf32>
    %cst_35 = arith.constant dense<0.000000e+00> : vector<2x128xf32>
    %62 = tpu.matmul %59, %61, %cst_35 {dimension_numbers = #tpu.dot_dimension_numbers<[1], [0], [0], [1], [0, 0, 1, 1], [], []>} : vector<2x40xf32>, vector<40x128xf32>, vector<2x128xf32> -> vector<2x128xf32>
    %63 = arith.addf %56, %62 : vector<2x128xf32>
    %c0_36 = arith.constant 0 : index
    %c0_37 = arith.constant 0 : index
    %64 = vector.load %arg6[%c0_36, %c0_37] : memref<1x128xf32, #tpu.memory_space<vmem>>, vector<1x128xf32>
    %65 = vector.broadcast %64 : vector<1x128xf32> to vector<2x128xf32>
    %66 = arith.addf %63, %65 : vector<2x128xf32>
    %cst_38 = arith.constant 0.000000e+00 : f32
    %67 = vector.broadcast %cst_38 : f32 to vector<2x128xf32>
    %68 = arith.maximumf %66, %67 : vector<2x128xf32>
    %c0_39 = arith.constant 0 : index
    %c0_40 = arith.constant 0 : index
    %69 = vector.load %arg7[%c0_39, %c0_40] : memref<2x128xf32, #tpu.memory_space<vmem>>, vector<2x128xf32>
    tpu.vector_store %arg7[%c0_39, %c0_40], %68 {strides = array<i32>} : memref<2x128xf32, #tpu.memory_space<vmem>>, vector<2x128xf32>,
    return
  }
}

</mosaic_0001>

<llo_original>
// kernel: forward.1
$region0: #{forward.1}
  #allocation0 [shape = 'u32[]', space=smem, size = 0x4, offset = 0x4, fixed_abs, tag = 'smem constant byte address 0x4 - core index']
  #allocation1 [shape = 'u32[144,128]{1,0:T(1,128)}', space=vmem, size = 0x12000, scoped, tag = 'internal scratch']
  %s0 = inlined_call_operand.vmem [shape: f32[32,64], index: 0, kind: input, shape index: {}]
  %s1 = inlined_call_operand.vmem [shape: f32[3,64,256], index: 1, kind: input, shape index: {}]
  %s2 = inlined_call_operand.vmem [shape: f32[1,128], index: 2, kind: input, shape index: {}]
  %s3 = inlined_call_operand.hbm [shape: f32[3,72,128], index: 3, kind: input, shape index: {}]
  %s4 = inlined_call_operand.vmem [shape: f32[1,64], index: 4, kind: input, shape index: {}]
  %s5 = inlined_call_operand.vmem [shape: f32[2,40,128], index: 5, kind: input, shape index: {}]
  %s6 = inlined_call_operand.vmem [shape: f32[1,128], index: 6, kind: input, shape index: {}]
  %s7 = inlined_call_operand.hbm [shape: f32[2,128], index: 7, kind: output, shape index: {}]
  %s8 = sld [smem:[#allocation0]]
  $region42: #{forward.1} parent=0
    _
  %s10 = ssub.s32 1, %s8
  %s11 = scalar_select 0, %s10, %s8
  $region1: #{forward.1} parent=0
    #allocation2 [shape = 'u8[110592]{0}', space=vmem, size = 0x1b000, scoped, tag = 'input window, operand 3, single buffered']
    #allocation3 [shape = 's32[1]{0}', space=sflag, size = 0x4, scoped, tag = 'scoped memory for forward.1']
    #allocation4 [shape = 's32[1]{0}', space=sflag, size = 0x4, scoped, tag = 'scoped memory for forward.1']
    #allocation5 [shape = 'u8[1024]{0}', space=vmem, size = 0x400, scoped, tag = 'output window, operand 0, single buffered']
    %12 = vsyncpa [#allocation3], 0
    %13 = vsyncpa [#allocation4], 0
    // Predicated region
    $region2: #{forward.1} parent=1 // pred_check
      _
    $region3: #{forward.1} parent=1 // pred_check_branch
      %15 = sbr.rel (0) target = $region5
    $region4: #{forward.1} parent=1 // pred_region
      _
    $region5: #{forward.1} parent=1 // pred_fallthru
      _
    // Predicated region
    $region6: #{forward.1} parent=1 // pred_check
      _
    $region7: #{forward.1} parent=1 // pred_check_branch
      %17 = sbr.rel (0) target = $region9
    $region8: #{forward.1} parent=1 // pred_region
      _
    $region9: #{forward.1} parent=1 // pred_fallthru
      _
    // Predicated region
    $region10: #{forward.1} parent=1 // pred_check
      _
    $region11: #{forward.1} parent=1 // pred_check_branch
      %19 = sbr.rel (0) target = $region13
    $region12: #{forward.1} parent=1 // pred_region
      _
    $region13: #{forward.1} parent=1 // pred_fallthru
      _
    // Predicated region
    $region14: #{forward.1} parent=1 // pred_check
      _
    $region15: #{forward.1} parent=1 // pred_check_branch
      %21 = sbr.rel (0) target = $region17
    $region16: #{forward.1} parent=1 // pred_region
      %s23 = ssub.s32 3456, 3456
      %24 = vsyncadd [#allocation3], %s23
      %s25 = sshll.u32 [#allocation2], 4
      %s26 = int_to_ptr.vmem [resolvable:$true] %s25
      %31 = dma.hbm_to_vmem [thread:$0]  %s3, 3456, %s26, [#allocation3], 128, 128, 8
    $region17: #{forward.1} parent=1 // pred_fallthru
      _
    // Predicated region
    $region18: #{forward.1} parent=1 // pred_check
      _
    $region19: #{forward.1} parent=1 // pred_check_branch
      %33 = sbr.rel (0) target = $region21
    $region20: #{forward.1} parent=1 // pred_region
      _
    $region21: #{forward.1} parent=1 // pred_fallthru
      _
    // Predicated region
    $region22: #{forward.1} parent=1 // pred_check
      _
    $region23: #{forward.1} parent=1 // pred_check_branch
      %35 = sbr.rel (0) target = $region25
    $region24: #{forward.1} parent=1 // pred_region
      _
    $region25: #{forward.1} parent=1 // pred_fallthru
      _
    // Predicated region
    $region26: #{forward.1} parent=1 // pred_check
      _
    $region27: #{forward.1} parent=1 // pred_check_branch
      %37 = sbr.rel (0) target = $region29
    $region28: #{forward.1} parent=1 // pred_region
      _
    $region29: #{forward.1} parent=1 // pred_fallthru
      _
    // Predicated region
    $region30: #{forward.1} parent=1 // pred_check
      _
    $region31: #{forward.1} parent=1 // pred_check_branch
      %39 = sbr.rel (0) target = $region33
    $region32: #{forward.1} parent=1 // pred_region
      %40 = dma.done [#allocation3], 3456
    $region33: #{forward.1} parent=1 // pred_fallthru
      _
    %v41 = vld [vmem:[%s0] sm:$0xff]
    %v42 = vld [vmem:[%s0 + $0x8] sm:$0xff]
    %v43 = vld [vmem:[%s0 + $0x10] sm:$0xff]
    %v44 = vld [vmem:[%s0 + $0x18] sm:$0xff]
    %v45 = vld [vmem:[%s1] sm:$0xff]
    %v46 = vld [vmem:[%s1 + $0x8] sm:$0xff]
    %v47 = vld [vmem:[%s1 + $0x10] sm:$0xff]
    %v48 = vld [vmem:[%s1 + $0x18] sm:$0xff]
    %v49 = vld [vmem:[%s1 + $0x20] sm:$0xff]
    %v50 = vld [vmem:[%s1 + $0x28] sm:$0xff]
    %v51 = vld [vmem:[%s1 + $0x30] sm:$0xff]
    %v52 = vld [vmem:[%s1 + $0x38] sm:$0xff]
    %v53 = vld [vmem:[%s1 + $0x40] sm:$0xff]
    %v54 = vld [vmem:[%s1 + $0x48] sm:$0xff]
    %v55 = vld [vmem:[%s1 + $0x50] sm:$0xff]
    %v56 = vld [vmem:[%s1 + $0x58] sm:$0xff]
    %v57 = vld [vmem:[%s1 + $0x60] sm:$0xff]
    %v58 = vld [vmem:[%s1 + $0x68] sm:$0xff]
    %v59 = vld [vmem:[%s1 + $0x70] sm:$0xff]
    %v60 = vld [vmem:[%s1 + $0x78] sm:$0xff]
    %s61 = scalar_lea.vmem %s1, 128
    %v62 = vld [vmem:[%s61] sm:$0xff]
    %v63 = vld [vmem:[%s61 + $0x8] sm:$0xff]
    %v64 = vld [vmem:[%s61 + $0x10] sm:$0xff]
    %v65 = vld [vmem:[%s61 + $0x18] sm:$0xff]
    %v66 = vld [vmem:[%s61 + $0x20] sm:$0xff]
    %v67 = vld [vmem:[%s61 + $0x28] sm:$0xff]
    %v68 = vld [vmem:[%s61 + $0x30] sm:$0xff]
    %v69 = vld [vmem:[%s61 + $0x38] sm:$0xff]
    %v70 = vld [vmem:[%s61 + $0x40] sm:$0xff]
    %v71 = vld [vmem:[%s61 + $0x48] sm:$0xff]
    %v72 = vld [vmem:[%s61 + $0x50] sm:$0xff]
    %v73 = vld [vmem:[%s61 + $0x58] sm:$0xff]
    %v74 = vld [vmem:[%s61 + $0x60] sm:$0xff]
    %v75 = vld [vmem:[%s61 + $0x68] sm:$0xff]
    %v76 = vld [vmem:[%s61 + $0x70] sm:$0xff]
    %v77 = vld [vmem:[%s61 + $0x78] sm:$0xff]
    %vm82 = vcmask 1046528
    %v83 = vrot.slane %v41, 1
    %v84 = vrot.slane %v42, 1
    %v85 = vsel %vm82, %v83, %v84
    %v86 = vrot.slane %v43, 1
    %v87 = vsel %vm82, %v84, %v86
    %v88 = vrot.slane %v44, 1
    %v89 = vsel %vm82, %v86, %v88
    %vm90 = vcmask 523264
    %v91 = vsel %vm90, %v85, 0
    %v93 = vsel %vm90, %v87, 0
    %v95 = vsel %vm90, %v89, 0
    %v97 = vsel %vm90, %v88, 0
    %99 = vmatprep.subr.mxu0 0.0
    %100 = vmatpush1.msra.mxu0 0.0
    %101 = vmatprep.subr.mxu0 0.0
    %102 = vmatpush1.msra.mxu0 0.0
    %103 = vmatprep.subr.mxu0 0.0
    %104 = vmatpush1.msra.mxu0 0.0
    %105 = vmatprep.subr.mxu0 0.0
    %106 = vmatpush1.msra.mxu0 0.0
    %107 = vmatprep.subr.mxu0 0.0
    %108 = vmatpush1.msra.mxu0 0.0
    %109 = vmatprep.subr.mxu0 0.0
    %110 = vmatpush1.msra.mxu0 0.0
    %111 = vmatprep.subr.mxu0 0.0
    %112 = vmatpush1.msra.mxu0 0.0
    %113 = vmatprep.subr.mxu0 0.0
    %114 = vmatpush1.msra.mxu0 0.0
    %115 = vmatprep.subr.mxu0 %v77
    %116 = vmatpush1.msra.mxu0 %v76
    %117 = vmatprep.subr.mxu0 %v75
    %118 = vmatpush1.msra.mxu0 %v74
    %119 = vmatprep.subr.mxu0 %v73
    %120 = vmatpush1.msra.mxu0 %v72
    %121 = vmatprep.subr.mxu0 %v71
    %122 = vmatpush1.msra.mxu0 %v70
    %123 = vmatprep.subr.mxu0 %v69
    %124 = vmatpush1.msra.mxu0 %v68
    %125 = vmatprep.subr.mxu0 %v67
    %126 = vmatpush1.msra.mxu0 %v66
    %127 = vmatprep.subr.mxu0 %v65
    %128 = vmatpush1.msra.mxu0 %v64
    %129 = vmatprep.subr.mxu0 %v63
    %130 = vmatpush1.msra.mxu0 %v62
    %131 = vmatprep.subr.mxu0 0.0
    %132 = vmatpush2.msra.mxu0 0.0
    %133 = vmatprep.subr.mxu0 0.0
    %134 = vmatpush2.msra.mxu0 0.0
    %135 = vmatprep.subr.mxu0 0.0
    %136 = vmatpush2.msra.mxu0 0.0
    %137 = vmatprep.subr.mxu0 0.0
    %138 = vmatpush2.msra.mxu0 0.0
    %139 = vmatprep.subr.mxu0 0.0
    %140 = vmatpush2.msra.mxu0 0.0
    %141 = vmatprep.subr.mxu0 0.0
    %142 = vmatpush2.msra.mxu0 0.0
    %143 = vmatprep.subr.mxu0 0.0
    %144 = vmatpush2.msra.mxu0 0.0
    %145 = vmatprep.subr.mxu0 0.0
    %146 = vmatpush2.msra.mxu0 0.0
    %147 = vmatprep.subr.mxu0 0.0
    %148 = vmatpush2.msra.mxu0 0.0
    %149 = vmatprep.subr.mxu0 0.0
    %150 = vmatpush2.msra.mxu0 0.0
    %151 = vmatprep.subr.mxu0 0.0
    %152 = vmatpush2.msra.mxu0 0.0
    %153 = vmatprep.subr.mxu0 0.0
    %154 = vmatpush2.msra.mxu0 0.0
    %155 = vmatprep.subr.mxu0 0.0
    %156 = vmatpush2.msra.mxu0 0.0
    %157 = vmatprep.subr.mxu0 0.0
    %158 = vmatpush2.msra.mxu0 0.0
    %159 = vmatprep.subr.mxu0 0.0
    %160 = vmatpush2.msra.mxu0 0.0
    %161 = vmatprep.subr.mxu0 0.0
    %162 = vmatpush2.msra.mxu0 0.0
    %163 = vmatprep.mubr.f32.mxu0 0.0
    %164 = vmatmul.mubr.f32.gmra.mxu0 %v91
    %v165 = vpop.f32.mrf.mxu0
    %v166 = vadd.f32 0.0, %v165
    %v167 = vpop.f32.mrf.mxu0
    %v168 = vadd.f32 0.0, %v167
    %169 = vmatprep.mubr.f32.mxu0 0.0
    %170 = vmatmul.mubr.f32.gmra.mxu0 %v93
    %v171 = vpop.f32.mrf.mxu0
    %v172 = vadd.f32 0.0, %v171
    %v173 = vpop.f32.mrf.mxu0
    %v174 = vadd.f32 0.0, %v173
    %175 = vmatprep.mubr.f32.mxu0 0.0
    %176 = vmatmul.mubr.f32.gmra.mxu0 %v95
    %v177 = vpop.f32.mrf.mxu0
    %v178 = vadd.f32 0.0, %v177
    %v179 = vpop.f32.mrf.mxu0
    %v180 = vadd.f32 0.0, %v179
    %181 = vmatprep.mubr.f32.mxu0 0.0
    %182 = vmatmul.mubr.f32.gmra.mxu0 %v97
    %v183 = vpop.f32.mrf.mxu0
    %v184 = vadd.f32 0.0, %v183
    %v185 = vpop.f32.mrf.mxu0
    %v186 = vadd.f32 0.0, %v185
    %187 = vdwg.mxu0
    %v188 = vsel %vm90, %v41, 0
    %v190 = vsel %vm90, %v42, 0
    %v192 = vsel %vm90, %v43, 0
    %v194 = vsel %vm90, %v44, 0
    %196 = vmatprep.subr.mxu0 0.0
    %197 = vmatpush1.msra.mxu0 0.0
    %198 = vmatprep.subr.mxu0 0.0
    %199 = vmatpush1.msra.mxu0 0.0
    %200 = vmatprep.subr.mxu0 0.0
    %201 = vmatpush1.msra.mxu0 0.0
    %202 = vmatprep.subr.mxu0 0.0
    %203 = vmatpush1.msra.mxu0 0.0
    %204 = vmatprep.subr.mxu0 0.0
    %205 = vmatpush1.msra.mxu0 0.0
    %206 = vmatprep.subr.mxu0 0.0
    %207 = vmatpush1.msra.mxu0 0.0
    %208 = vmatprep.subr.mxu0 0.0
    %209 = vmatpush1.msra.mxu0 0.0
    %210 = vmatprep.subr.mxu0 0.0
    %211 = vmatpush1.msra.mxu0 0.0
    %212 = vmatprep.subr.mxu0 %v60
    %213 = vmatpush1.msra.mxu0 %v59
    %214 = vmatprep.subr.mxu0 %v58
    %215 = vmatpush1.msra.mxu0 %v57
    %216 = vmatprep.subr.mxu0 %v56
    %217 = vmatpush1.msra.mxu0 %v55
    %218 = vmatprep.subr.mxu0 %v54
    %219 = vmatpush1.msra.mxu0 %v53
    %220 = vmatprep.subr.mxu0 %v52
    %221 = vmatpush1.msra.mxu0 %v51
    %222 = vmatprep.subr.mxu0 %v50
    %223 = vmatpush1.msra.mxu0 %v49
    %224 = vmatprep.subr.mxu0 %v48
    %225 = vmatpush1.msra.mxu0 %v47
    %226 = vmatprep.subr.mxu0 %v46
    %227 = vmatpush1.msra.mxu0 %v45
    %228 = vmatprep.subr.mxu0 0.0
    %229 = vmatpush2.msra.mxu0 0.0
    %230 = vmatprep.subr.mxu0 0.0
    %231 = vmatpush2.msra.mxu0 0.0
    %232 = vmatprep.subr.mxu0 0.0
    %233 = vmatpush2.msra.mxu0 0.0
    %234 = vmatprep.subr.mxu0 0.0
    %235 = vmatpush2.msra.mxu0 0.0
    %236 = vmatprep.subr.mxu0 0.0
    %237 = vmatpush2.msra.mxu0 0.0
    %238 = vmatprep.subr.mxu0 0.0
    %239 = vmatpush2.msra.mxu0 0.0
    %240 = vmatprep.subr.mxu0 0.0
    %241 = vmatpush2.msra.mxu0 0.0
    %242 = vmatprep.subr.mxu0 0.0
    %243 = vmatpush2.msra.mxu0 0.0
    %244 = vmatprep.subr.mxu0 0.0
    %245 = vmatpush2.msra.mxu0 0.0
    %246 = vmatprep.subr.mxu0 0.0
    %247 = vmatpush2.msra.mxu0 0.0
    %248 = vmatprep.subr.mxu0 0.0
    %249 = vmatpush2.msra.mxu0 0.0
    %250 = vmatprep.subr.mxu0 0.0
    %251 = vmatpush2.msra.mxu0 0.0
    %252 = vmatprep.subr.mxu0 0.0
    %253 = vmatpush2.msra.mxu0 0.0
    %254 = vmatprep.subr.mxu0 0.0
    %255 = vmatpush2.msra.mxu0 0.0
    %256 = vmatprep.subr.mxu0 0.0
    %257 = vmatpush2.msra.mxu0 0.0
    %258 = vmatprep.subr.mxu0 0.0
    %259 = vmatpush2.msra.mxu0 0.0
    %260 = vmatprep.mubr.f32.mxu0 0.0
    %261 = vmatmul.mubr.f32.gmra.mxu0 %v188
    %v262 = vpop.f32.mrf.mxu0
    %v263 = vadd.f32 %v166, %v262
    %v264 = vpop.f32.mrf.mxu0
    %v265 = vadd.f32 %v168, %v264
    %266 = vmatprep.mubr.f32.mxu0 0.0
    %267 = vmatmul.mubr.f32.gmra.mxu0 %v190
    %v268 = vpop.f32.mrf.mxu0
    %v269 = vadd.f32 %v172, %v268
    %v270 = vpop.f32.mrf.mxu0
    %v271 = vadd.f32 %v174, %v270
    %272 = vmatprep.mubr.f32.mxu0 0.0
    %273 = vmatmul.mubr.f32.gmra.mxu0 %v192
    %v274 = vpop.f32.mrf.mxu0
    %v275 = vadd.f32 %v178, %v274
    %v276 = vpop.f32.mrf.mxu0
    %v277 = vadd.f32 %v180, %v276
    %278 = vmatprep.mubr.f32.mxu0 0.0
    %279 = vmatmul.mubr.f32.gmra.mxu0 %v194
    %v280 = vpop.f32.mrf.mxu0
    %v281 = vadd.f32 %v184, %v280
    %v282 = vpop.f32.mrf.mxu0
    %v283 = vadd.f32 %v186, %v282
    %284 = vdwg.mxu0
    %s285 = scalar_lea.vmem %s1, 256
    %v286 = vld [vmem:[%s285] sm:$0xff]
    %v287 = vld [vmem:[%s285 + $0x8] sm:$0xff]
    %v288 = vld [vmem:[%s285 + $0x10] sm:$0xff]
    %v289 = vld [vmem:[%s285 + $0x18] sm:$0xff]
    %v290 = vld [vmem:[%s285 + $0x20] sm:$0xff]
    %v291 = vld [vmem:[%s285 + $0x28] sm:$0xff]
    %v292 = vld [vmem:[%s285 + $0x30] sm:$0xff]
    %v293 = vld [vmem:[%s285 + $0x38] sm:$0xff]
    %v294 = vld [vmem:[%s285 + $0x40] sm:$0xff]
    %v295 = vld [vmem:[%s285 + $0x48] sm:$0xff]
    %v296 = vld [vmem:[%s285 + $0x50] sm:$0xff]
    %v297 = vld [vmem:[%s285 + $0x58] sm:$0xff]
    %v298 = vld [vmem:[%s285 + $0x60] sm:$0xff]
    %v299 = vld [vmem:[%s285 + $0x68] sm:$0xff]
    %v300 = vld [vmem:[%s285 + $0x70] sm:$0xff]
    %v301 = vld [vmem:[%s285 + $0x78] sm:$0xff]
    %vm302 = vcmask 1045504
    %v303 = vrot.slane %v41, 2
    %v304 = vrot.slane %v42, 2
    %v305 = vsel %vm302, %v303, %v304
    %v306 = vrot.slane %v43, 2
    %v307 = vsel %vm302, %v304, %v306
    %v308 = vrot.slane %v44, 2
    %v309 = vsel %vm302, %v306, %v308
    %v310 = vsel %vm90, %v305, 0
    %v312 = vsel %vm90, %v307, 0
    %v314 = vsel %vm90, %v309, 0
    %v316 = vsel %vm90, %v308, 0
    %318 = vmatprep.subr.mxu0 0.0
    %319 = vmatpush1.msra.mxu0 0.0
    %320 = vmatprep.subr.mxu0 0.0
    %321 = vmatpush1.msra.mxu0 0.0
    %322 = vmatprep.subr.mxu0 0.0
    %323 = vmatpush1.msra.mxu0 0.0
    %324 = vmatprep.subr.mxu0 0.0
    %325 = vmatpush1.msra.mxu0 0.0
    %326 = vmatprep.subr.mxu0 0.0
    %327 = vmatpush1.msra.mxu0 0.0
    %328 = vmatprep.subr.mxu0 0.0
    %329 = vmatpush1.msra.mxu0 0.0
    %330 = vmatprep.subr.mxu0 0.0
    %331 = vmatpush1.msra.mxu0 0.0
    %332 = vmatprep.subr.mxu0 0.0
    %333 = vmatpush1.msra.mxu0 0.0
    %334 = vmatprep.subr.mxu0 %v301
    %335 = vmatpush1.msra.mxu0 %v300
    %336 = vmatprep.subr.mxu0 %v299
    %337 = vmatpush1.msra.mxu0 %v298
    %338 = vmatprep.subr.mxu0 %v297
    %339 = vmatpush1.msra.mxu0 %v296
    %340 = vmatprep.subr.mxu0 %v295
    %341 = vmatpush1.msra.mxu0 %v294
    %342 = vmatprep.subr.mxu0 %v293
    %343 = vmatpush1.msra.mxu0 %v292
    %344 = vmatprep.subr.mxu0 %v291
    %345 = vmatpush1.msra.mxu0 %v290
    %346 = vmatprep.subr.mxu0 %v289
    %347 = vmatpush1.msra.mxu0 %v288
    %348 = vmatprep.subr.mxu0 %v287
    %349 = vmatpush1.msra.mxu0 %v286
    %350 = vmatprep.subr.mxu0 0.0
    %351 = vmatpush2.msra.mxu0 0.0
    %352 = vmatprep.subr.mxu0 0.0
    %353 = vmatpush2.msra.mxu0 0.0
    %354 = vmatprep.subr.mxu0 0.0
    %355 = vmatpush2.msra.mxu0 0.0
    %356 = vmatprep.subr.mxu0 0.0
    %357 = vmatpush2.msra.mxu0 0.0
    %358 = vmatprep.subr.mxu0 0.0
    %359 = vmatpush2.msra.mxu0 0.0
    %360 = vmatprep.subr.mxu0 0.0
    %361 = vmatpush2.msra.mxu0 0.0
    %362 = vmatprep.subr.mxu0 0.0
    %363 = vmatpush2.msra.mxu0 0.0
    %364 = vmatprep.subr.mxu0 0.0
    %365 = vmatpush2.msra.mxu0 0.0
    %366 = vmatprep.subr.mxu0 0.0
    %367 = vmatpush2.msra.mxu0 0.0
    %368 = vmatprep.subr.mxu0 0.0
    %369 = vmatpush2.msra.mxu0 0.0
    %370 = vmatprep.subr.mxu0 0.0
    %371 = vmatpush2.msra.mxu0 0.0
    %372 = vmatprep.subr.mxu0 0.0
    %373 = vmatpush2.msra.mxu0 0.0
    %374 = vmatprep.subr.mxu0 0.0
    %375 = vmatpush2.msra.mxu0 0.0
    %376 = vmatprep.subr.mxu0 0.0
    %377 = vmatpush2.msra.mxu0 0.0
    %378 = vmatprep.subr.mxu0 0.0
    %379 = vmatpush2.msra.mxu0 0.0
    %380 = vmatprep.subr.mxu0 0.0
    %381 = vmatpush2.msra.mxu0 0.0
    %382 = vmatprep.mubr.f32.mxu0 0.0
    %383 = vmatmul.mubr.f32.gmra.mxu0 %v310
    %v384 = vpop.f32.mrf.mxu0
    %v385 = vadd.f32 0.0, %v384
    %v386 = vpop.f32.mrf.mxu0
    %v387 = vadd.f32 0.0, %v386
    %388 = vmatprep.mubr.f32.mxu0 0.0
    %389 = vmatmul.mubr.f32.gmra.mxu0 %v312
    %v390 = vpop.f32.mrf.mxu0
    %v391 = vadd.f32 0.0, %v390
    %v392 = vpop.f32.mrf.mxu0
    %v393 = vadd.f32 0.0, %v392
    %394 = vmatprep.mubr.f32.mxu0 0.0
    %395 = vmatmul.mubr.f32.gmra.mxu0 %v314
    %v396 = vpop.f32.mrf.mxu0
    %v397 = vadd.f32 0.0, %v396
    %v398 = vpop.f32.mrf.mxu0
    %v399 = vadd.f32 0.0, %v398
    %400 = vmatprep.mubr.f32.mxu0 0.0
    %401 = vmatmul.mubr.f32.gmra.mxu0 %v316
    %v402 = vpop.f32.mrf.mxu0
    %v403 = vadd.f32 0.0, %v402
    %v404 = vpop.f32.mrf.mxu0
    %v405 = vadd.f32 0.0, %v404
    %406 = vdwg.mxu0
    %v407 = vadd.f32 %v263, %v385
    %v408 = vadd.f32 %v265, %v387
    %v409 = vadd.f32 %v269, %v391
    %v410 = vadd.f32 %v271, %v393
    %v411 = vadd.f32 %v275, %v397
    %v412 = vadd.f32 %v277, %v399
    %v413 = vadd.f32 %v281, %v403
    %v414 = vadd.f32 %v283, %v405
    %v415 = vmax.f32 %v407, %v408
    %v416 = vmax.f32 %v409, %v410
    %v417 = vmax.f32 %v411, %v412
    %v418 = vmax.f32 %v413, %v414
    %v423 = vrot.slane %v415, 1
    %v424 = vrot.slane %v416, 1
    %v425 = vsel %vm82, %v423, %v424
    %v426 = vrot.slane %v417, 1
    %v427 = vsel %vm82, %v424, %v426
    %v428 = vrot.slane %v418, 1
    %v429 = vsel %vm82, %v426, %v428
    %v434 = vmax.f32 %v415, %v425
    %v435 = vmax.f32 %v416, %v427
    %v436 = vmax.f32 %v417, %v429
    %v437 = vmax.f32 %v418, %v428
    %v438 = vld [vmem:[%s2] sm:$0x1]
    %v440 = vlaneseq
    %v441 = vshrl.u32 %v440, 7
    %v442 = vsub.s32 0, %v441
    %v443 = vrot.slane %v438, %v442
    %v445 = vadd.f32 %v434, %v443
    %v446 = vadd.f32 %v435, %v443
    %v447 = vadd.f32 %v436, %v443
    %v448 = vadd.f32 %v437, %v443
    %v449 = vmax.f32 %v445, 0.0
    %v450 = vmax.f32 %v446, 0.0
    %v451 = vmax.f32 %v447, 0.0
    %v452 = vmax.f32 %v448, 0.0
    %v453 = vld [vmem:[#allocation2] sm:$0xff]
    %v454 = vld [vmem:[#allocation2 + $0x8] sm:$0xff]
    %v455 = vld [vmem:[#allocation2 + $0x10] sm:$0xff]
    %v456 = vld [vmem:[#allocation2 + $0x18] sm:$0xff]
    %v457 = vld [vmem:[#allocation2 + $0x20] sm:$0xff]
    %v458 = vld [vmem:[#allocation2 + $0x28] sm:$0xff]
    %v459 = vld [vmem:[#allocation2 + $0x30] sm:$0xff]
    %v460 = vld [vmem:[#allocation2 + $0x38] sm:$0xff]
    %v461 = vld [vmem:[#allocation2 + $0x40] sm:$0xff]
    %s462 = scalar_lea.vmem [#allocation2], 72
    %v463 = vld [vmem:[%s462] sm:$0xff]
    %v464 = vld [vmem:[%s462 + $0x8] sm:$0xff]
    %v465 = vld [vmem:[%s462 + $0x10] sm:$0xff]
    %v466 = vld [vmem:[%s462 + $0x18] sm:$0xff]
    %v467 = vld [vmem:[%s462 + $0x20] sm:$0xff]
    %v468 = vld [vmem:[%s462 + $0x28] sm:$0xff]
    %v469 = vld [vmem:[%s462 + $0x30] sm:$0xff]
    %v470 = vld [vmem:[%s462 + $0x38] sm:$0xff]
    %v471 = vld [vmem:[%s462 + $0x40] sm:$0xff]
    %v476 = vrot.slane %v449, 2
    %v477 = vrot.slane %v450, 2
    %v478 = vsel %vm302, %v476, %v477
    %v479 = vrot.slane %v451, 2
    %v480 = vsel %vm302, %v477, %v479
    %v481 = vrot.slane %v452, 2
    %v482 = vsel %vm302, %v479, %v481
    %vm483 = vcmask 588800
    %v484 = vsel %vm483, %v478, 0
    %v486 = vsel %vm483, %v480, 0
    %v488 = vsel %vm483, %v482, 0
    %v490 = vsel %vm483, %v481, 0
    %492 = vmatprep.subr.mxu0 0.0
    %493 = vmatpush1.msra.mxu0 0.0
    %494 = vmatprep.subr.mxu0 0.0
    %495 = vmatpush1.msra.mxu0 0.0
    %496 = vmatprep.subr.mxu0 0.0
    %497 = vmatpush1.msra.mxu0 0.0
    %498 = vmatprep.subr.mxu0 0.0
    %499 = vmatpush1.msra.mxu0 0.0
    %500 = vmatprep.subr.mxu0 0.0
    %501 = vmatpush1.msra.mxu0 0.0
    %502 = vmatprep.subr.mxu0 0.0
    %503 = vmatpush1.msra.mxu0 0.0
    %504 = vmatprep.subr.mxu0 0.0
    %505 = vmatpush1.msra.mxu0 0.0
    %506 = vmatprep.subr.mxu0 0.0
    %507 = vmatpush1.msra.mxu0 %v471
    %508 = vmatprep.subr.mxu0 0.0
    %509 = vmatpush1.msra.mxu0 %v470
    %510 = vmatprep.subr.mxu0 0.0
    %511 = vmatpush1.msra.mxu0 %v469
    %512 = vmatprep.subr.mxu0 0.0
    %513 = vmatpush1.msra.mxu0 %v468
    %514 = vmatprep.subr.mxu0 0.0
    %515 = vmatpush1.msra.mxu0 %v467
    %516 = vmatprep.subr.mxu0 0.0
    %517 = vmatpush1.msra.mxu0 %v466
    %518 = vmatprep.subr.mxu0 0.0
    %519 = vmatpush1.msra.mxu0 %v465
    %520 = vmatprep.subr.mxu0 0.0
    %521 = vmatpush1.msra.mxu0 %v464
    %522 = vmatprep.subr.mxu0 0.0
    %523 = vmatpush1.msra.mxu0 %v463
    %524 = vmatprep.subr.mxu0 0.0
    %525 = vmatpush2.msra.mxu0 0.0
    %526 = vmatprep.subr.mxu0 0.0
    %527 = vmatpush2.msra.mxu0 0.0
    %528 = vmatprep.subr.mxu0 0.0
    %529 = vmatpush2.msra.mxu0 0.0
    %530 = vmatprep.subr.mxu0 0.0
    %531 = vmatpush2.msra.mxu0 0.0
    %532 = vmatprep.subr.mxu0 0.0
    %533 = vmatpush2.msra.mxu0 0.0
    %534 = vmatprep.subr.mxu0 0.0
    %535 = vmatpush2.msra.mxu0 0.0
    %536 = vmatprep.subr.mxu0 0.0
    %537 = vmatpush2.msra.mxu0 0.0
    %538 = vmatprep.subr.mxu0 0.0
    %539 = vmatpush2.msra.mxu0 0.0
    %540 = vmatprep.subr.mxu0 0.0
    %541 = vmatpush2.msra.mxu0 0.0
    %542 = vmatprep.subr.mxu0 0.0
    %543 = vmatpush2.msra.mxu0 0.0
    %544 = vmatprep.subr.mxu0 0.0
    %545 = vmatpush2.msra.mxu0 0.0
    %546 = vmatprep.subr.mxu0 0.0
    %547 = vmatpush2.msra.mxu0 0.0
    %548 = vmatprep.subr.mxu0 0.0
    %549 = vmatpush2.msra.mxu0 0.0
    %550 = vmatprep.subr.mxu0 0.0
    %551 = vmatpush2.msra.mxu0 0.0
    %552 = vmatprep.subr.mxu0 0.0
    %553 = vmatpush2.msra.mxu0 0.0
    %554 = vmatprep.subr.mxu0 0.0
    %555 = vmatpush2.msra.mxu0 0.0
    %556 = vmatprep.mubr.f32.mxu0 0.0
    %557 = vmatmul.mubr.f32.gmra.mxu0 %v484
    %v558 = vpop.f32.mrf.mxu0
    %v559 = vadd.f32 0.0, %v558
    %v560 = vpop.f32.mrf.mxu0
    %561 = vmatprep.mubr.f32.mxu0 0.0
    %562 = vmatmul.mubr.f32.gmra.mxu0 %v486
    %v563 = vpop.f32.mrf.mxu0
    %v564 = vadd.f32 0.0, %v563
    %v565 = vpop.f32.mrf.mxu0
    %566 = vmatprep.mubr.f32.mxu0 0.0
    %567 = vmatmul.mubr.f32.gmra.mxu0 %v488
    %v568 = vpop.f32.mrf.mxu0
    %v569 = vadd.f32 0.0, %v568
    %v570 = vpop.f32.mrf.mxu0
    %571 = vmatprep.mubr.f32.mxu0 0.0
    %572 = vmatmul.mubr.f32.gmra.mxu0 %v490
    %v573 = vpop.f32.mrf.mxu0
    %v574 = vadd.f32 0.0, %v573
    %v575 = vpop.f32.mrf.mxu0
    %576 = vdwg.mxu0
    %v577 = vsel %vm483, %v449, 0
    %v579 = vsel %vm483, %v450, 0
    %v581 = vsel %vm483, %v451, 0
    %v583 = vsel %vm483, %v452, 0
    %585 = vmatprep.subr.mxu0 0.0
    %586 = vmatpush1.msra.mxu0 0.0
    %587 = vmatprep.subr.mxu0 0.0
    %588 = vmatpush1.msra.mxu0 0.0
    %589 = vmatprep.subr.mxu0 0.0
    %590 = vmatpush1.msra.mxu0 0.0
    %591 = vmatprep.subr.mxu0 0.0
    %592 = vmatpush1.msra.mxu0 0.0
    %593 = vmatprep.subr.mxu0 0.0
    %594 = vmatpush1.msra.mxu0 0.0
    %595 = vmatprep.subr.mxu0 0.0
    %596 = vmatpush1.msra.mxu0 0.0
    %597 = vmatprep.subr.mxu0 0.0
    %598 = vmatpush1.msra.mxu0 0.0
    %599 = vmatprep.subr.mxu0 0.0
    %600 = vmatpush1.msra.mxu0 %v461
    %601 = vmatprep.subr.mxu0 0.0
    %602 = vmatpush1.msra.mxu0 %v460
    %603 = vmatprep.subr.mxu0 0.0
    %604 = vmatpush1.msra.mxu0 %v459
    %605 = vmatprep.subr.mxu0 0.0
    %606 = vmatpush1.msra.mxu0 %v458
    %607 = vmatprep.subr.mxu0 0.0
    %608 = vmatpush1.msra.mxu0 %v457
    %609 = vmatprep.subr.mxu0 0.0
    %610 = vmatpush1.msra.mxu0 %v456
    %611 = vmatprep.subr.mxu0 0.0
    %612 = vmatpush1.msra.mxu0 %v455
    %613 = vmatprep.subr.mxu0 0.0
    %614 = vmatpush1.msra.mxu0 %v454
    %615 = vmatprep.subr.mxu0 0.0
    %616 = vmatpush1.msra.mxu0 %v453
    %617 = vmatprep.subr.mxu0 0.0
    %618 = vmatpush2.msra.mxu0 0.0
    %619 = vmatprep.subr.mxu0 0.0
    %620 = vmatpush2.msra.mxu0 0.0
    %621 = vmatprep.subr.mxu0 0.0
    %622 = vmatpush2.msra.mxu0 0.0
    %623 = vmatprep.subr.mxu0 0.0
    %624 = vmatpush2.msra.mxu0 0.0
    %625 = vmatprep.subr.mxu0 0.0
    %626 = vmatpush2.msra.mxu0 0.0
    %627 = vmatprep.subr.mxu0 0.0
    %628 = vmatpush2.msra.mxu0 0.0
    %629 = vmatprep.subr.mxu0 0.0
    %630 = vmatpush2.msra.mxu0 0.0
    %631 = vmatprep.subr.mxu0 0.0
    %632 = vmatpush2.msra.mxu0 0.0
    %633 = vmatprep.subr.mxu0 0.0
    %634 = vmatpush2.msra.mxu0 0.0
    %635 = vmatprep.subr.mxu0 0.0
    %636 = vmatpush2.msra.mxu0 0.0
    %637 = vmatprep.subr.mxu0 0.0
    %638 = vmatpush2.msra.mxu0 0.0
    %639 = vmatprep.subr.mxu0 0.0
    %640 = vmatpush2.msra.mxu0 0.0
    %641 = vmatprep.subr.mxu0 0.0
    %642 = vmatpush2.msra.mxu0 0.0
    %643 = vmatprep.subr.mxu0 0.0
    %644 = vmatpush2.msra.mxu0 0.0
    %645 = vmatprep.subr.mxu0 0.0
    %646 = vmatpush2.msra.mxu0 0.0
    %647 = vmatprep.subr.mxu0 0.0
    %648 = vmatpush2.msra.mxu0 0.0
    %649 = vmatprep.mubr.f32.mxu0 0.0
    %650 = vmatmul.mubr.f32.gmra.mxu0 %v577
    %v651 = vpop.f32.mrf.mxu0
    %v652 = vadd.f32 %v559, %v651
    %v653 = vpop.f32.mrf.mxu0
    %654 = vmatprep.mubr.f32.mxu0 0.0
    %655 = vmatmul.mubr.f32.gmra.mxu0 %v579
    %v656 = vpop.f32.mrf.mxu0
    %v657 = vadd.f32 %v564, %v656
    %v658 = vpop.f32.mrf.mxu0
    %659 = vmatprep.mubr.f32.mxu0 0.0
    %660 = vmatmul.mubr.f32.gmra.mxu0 %v581
    %v661 = vpop.f32.mrf.mxu0
    %v662 = vadd.f32 %v569, %v661
    %v663 = vpop.f32.mrf.mxu0
    %664 = vmatprep.mubr.f32.mxu0 0.0
    %665 = vmatmul.mubr.f32.gmra.mxu0 %v583
    %v666 = vpop.f32.mrf.mxu0
    %v667 = vadd.f32 %v574, %v666
    %v668 = vpop.f32.mrf.mxu0
    %669 = vdwg.mxu0
    %s670 = scalar_lea.vmem [#allocation2], 144
    %v671 = vld [vmem:[%s670] sm:$0xff]
    %v672 = vld [vmem:[%s670 + $0x8] sm:$0xff]
    %v673 = vld [vmem:[%s670 + $0x10] sm:$0xff]
    %v674 = vld [vmem:[%s670 + $0x18] sm:$0xff]
    %v675 = vld [vmem:[%s670 + $0x20] sm:$0xff]
    %v676 = vld [vmem:[%s670 + $0x28] sm:$0xff]
    %v677 = vld [vmem:[%s670 + $0x30] sm:$0xff]
    %v678 = vld [vmem:[%s670 + $0x38] sm:$0xff]
    %v679 = vld [vmem:[%s670 + $0x40] sm:$0xff]
    %vm680 = vcmask 1043456
    %v681 = vrot.slane %v449, 4
    %v682 = vrot.slane %v450, 4
    %v683 = vsel %vm680, %v681, %v682
    %v684 = vrot.slane %v451, 4
    %v685 = vsel %vm680, %v682, %v684
    %v686 = vrot.slane %v452, 4
    %v687 = vsel %vm680, %v684, %v686
    %v688 = vsel %vm483, %v683, 0
    %v690 = vsel %vm483, %v685, 0
    %v692 = vsel %vm483, %v687, 0
    %v694 = vsel %vm483, %v686, 0
    %696 = vmatprep.subr.mxu0 0.0
    %697 = vmatpush1.msra.mxu0 0.0
    %698 = vmatprep.subr.mxu0 0.0
    %699 = vmatpush1.msra.mxu0 0.0
    %700 = vmatprep.subr.mxu0 0.0
    %701 = vmatpush1.msra.mxu0 0.0
    %702 = vmatprep.subr.mxu0 0.0
    %703 = vmatpush1.msra.mxu0 0.0
    %704 = vmatprep.subr.mxu0 0.0
    %705 = vmatpush1.msra.mxu0 0.0
    %706 = vmatprep.subr.mxu0 0.0
    %707 = vmatpush1.msra.mxu0 0.0
    %708 = vmatprep.subr.mxu0 0.0
    %709 = vmatpush1.msra.mxu0 0.0
    %710 = vmatprep.subr.mxu0 0.0
    %711 = vmatpush1.msra.mxu0 %v679
    %712 = vmatprep.subr.mxu0 0.0
    %713 = vmatpush1.msra.mxu0 %v678
    %714 = vmatprep.subr.mxu0 0.0
    %715 = vmatpush1.msra.mxu0 %v677
    %716 = vmatprep.subr.mxu0 0.0
    %717 = vmatpush1.msra.mxu0 %v676
    %718 = vmatprep.subr.mxu0 0.0
    %719 = vmatpush1.msra.mxu0 %v675
    %720 = vmatprep.subr.mxu0 0.0
    %721 = vmatpush1.msra.mxu0 %v674
    %722 = vmatprep.subr.mxu0 0.0
    %723 = vmatpush1.msra.mxu0 %v673
    %724 = vmatprep.subr.mxu0 0.0
    %725 = vmatpush1.msra.mxu0 %v672
    %726 = vmatprep.subr.mxu0 0.0
    %727 = vmatpush1.msra.mxu0 %v671
    %728 = vmatprep.subr.mxu0 0.0
    %729 = vmatpush2.msra.mxu0 0.0
    %730 = vmatprep.subr.mxu0 0.0
    %731 = vmatpush2.msra.mxu0 0.0
    %732 = vmatprep.subr.mxu0 0.0
    %733 = vmatpush2.msra.mxu0 0.0
    %734 = vmatprep.subr.mxu0 0.0
    %735 = vmatpush2.msra.mxu0 0.0
    %736 = vmatprep.subr.mxu0 0.0
    %737 = vmatpush2.msra.mxu0 0.0
    %738 = vmatprep.subr.mxu0 0.0
    %739 = vmatpush2.msra.mxu0 0.0
    %740 = vmatprep.subr.mxu0 0.0
    %741 = vmatpush2.msra.mxu0 0.0
    %742 = vmatprep.subr.mxu0 0.0
    %743 = vmatpush2.msra.mxu0 0.0
    %744 = vmatprep.subr.mxu0 0.0
    %745 = vmatpush2.msra.mxu0 0.0
    %746 = vmatprep.subr.mxu0 0.0
    %747 = vmatpush2.msra.mxu0 0.0
    %748 = vmatprep.subr.mxu0 0.0
    %749 = vmatpush2.msra.mxu0 0.0
    %750 = vmatprep.subr.mxu0 0.0
    %751 = vmatpush2.msra.mxu0 0.0
    %752 = vmatprep.subr.mxu0 0.0
    %753 = vmatpush2.msra.mxu0 0.0
    %754 = vmatprep.subr.mxu0 0.0
    %755 = vmatpush2.msra.mxu0 0.0
    %756 = vmatprep.subr.mxu0 0.0
    %757 = vmatpush2.msra.mxu0 0.0
    %758 = vmatprep.subr.mxu0 0.0
    %759 = vmatpush2.msra.mxu0 0.0
    %760 = vmatprep.mubr.f32.mxu0 0.0
    %761 = vmatmul.mubr.f32.gmra.mxu0 %v688
    %v762 = vpop.f32.mrf.mxu0
    %v763 = vadd.f32 0.0, %v762
    %v764 = vpop.f32.mrf.mxu0
    %765 = vmatprep.mubr.f32.mxu0 0.0
    %766 = vmatmul.mubr.f32.gmra.mxu0 %v690
    %v767 = vpop.f32.mrf.mxu0
    %v768 = vadd.f32 0.0, %v767
    %v769 = vpop.f32.mrf.mxu0
    %770 = vmatprep.mubr.f32.mxu0 0.0
    %771 = vmatmul.mubr.f32.gmra.mxu0 %v692
    %v772 = vpop.f32.mrf.mxu0
    %v773 = vadd.f32 0.0, %v772
    %v774 = vpop.f32.mrf.mxu0
    %775 = vmatprep.mubr.f32.mxu0 0.0
    %776 = vmatmul.mubr.f32.gmra.mxu0 %v694
    %v777 = vpop.f32.mrf.mxu0
    %v778 = vadd.f32 0.0, %v777
    %v779 = vpop.f32.mrf.mxu0
    %780 = vdwg.mxu0
    %v781 = vadd.f32 %v652, %v763
    %v782 = vadd.f32 %v657, %v768
    %v783 = vadd.f32 %v662, %v773
    %v784 = vadd.f32 %v667, %v778
    %789 = vrot.lane.b32.xlu0 %v781, 64
    %v790 = vpop.permute.xlu0 %789
    %791 = vrot.lane.b32.xlu0 %v782, 64
    %v792 = vpop.permute.xlu0 %791
    %793 = vrot.lane.b32.xlu0 %v783, 64
    %v794 = vpop.permute.xlu0 %793
    %795 = vrot.lane.b32.xlu0 %v784, 64
    %v796 = vpop.permute.xlu0 %795
    %v801 = vmax.f32 %v781, %v790
    %v802 = vmax.f32 %v782, %v792
    %v803 = vmax.f32 %v783, %v794
    %v804 = vmax.f32 %v784, %v796
    %v809 = vrot.slane %v801, 2
    %v810 = vrot.slane %v802, 2
    %v811 = vsel %vm302, %v809, %v810
    %v812 = vrot.slane %v803, 2
    %v813 = vrot.slane %v804, 2
    %v814 = vsel %vm302, %v812, %v813
    %v817 = vmax.f32 %v801, %v811
    %v818 = vmax.f32 %v803, %v814
    %v819 = vld [vmem:[%s4] sm:$0x1]
    %v821 = vlaneseq
    %v822 = vshrl.u32 %v821, 7
    %v823 = vsub.s32 0, %v822
    %v824 = vrot.slane %v819, %v823
    %v826 = vadd.f32 %v817, %v824
    %v827 = vadd.f32 %v818, %v824
    %v828 = vmax.f32 %v826, 0.0
    %v829 = vmax.f32 %v827, 0.0
    %v831 = vrot.slane %v829, 7
    %vm833 = vcmask 1040384
    %v834 = vsel %vm833, %v828, %v831
    %v835 = vld [vmem:[%s5] sm:$0xff]
    %v836 = vld [vmem:[%s5 + $0x8] sm:$0xff]
    %v837 = vld [vmem:[%s5 + $0x10] sm:$0xff]
    %v838 = vld [vmem:[%s5 + $0x18] sm:$0xff]
    %v839 = vld [vmem:[%s5 + $0x20] sm:$0xff]
    %v841 = vrot.slane %v828, 4
    %v843 = vrot.slane %v829, 3
    %v845 = vsel %vm833, %v841, %v843
    %s846 = scalar_lea.vmem %s5, 40
    %v847 = vld [vmem:[%s846] sm:$0xff]
    %v848 = vld [vmem:[%s846 + $0x8] sm:$0xff]
    %v849 = vld [vmem:[%s846 + $0x10] sm:$0xff]
    %v850 = vld [vmem:[%s846 + $0x18] sm:$0xff]
    %v851 = vld [vmem:[%s846 + $0x20] sm:$0xff]
    %vm852 = vcmask 326656
    %v854 = vsel %vm852, %v845, 0
    %856 = vmatprep.subr.mxu0 0.0
    %857 = vmatpush1.msra.mxu0 0.0
    %858 = vmatprep.subr.mxu0 0.0
    %859 = vmatpush1.msra.mxu0 0.0
    %860 = vmatprep.subr.mxu0 0.0
    %861 = vmatpush1.msra.mxu0 0.0
    %862 = vmatprep.subr.mxu0 0.0
    %863 = vmatpush1.msra.mxu0 0.0
    %864 = vmatprep.subr.mxu0 0.0
    %865 = vmatpush1.msra.mxu0 0.0
    %866 = vmatprep.subr.mxu0 0.0
    %867 = vmatpush1.msra.mxu0 0.0
    %868 = vmatprep.subr.mxu0 0.0
    %869 = vmatpush1.msra.mxu0 0.0
    %870 = vmatprep.subr.mxu0 0.0
    %871 = vmatpush1.msra.mxu0 0.0
    %872 = vmatprep.subr.mxu0 0.0
    %873 = vmatpush1.msra.mxu0 0.0
    %874 = vmatprep.subr.mxu0 0.0
    %875 = vmatpush1.msra.mxu0 0.0
    %876 = vmatprep.subr.mxu0 0.0
    %877 = vmatpush1.msra.mxu0 0.0
    %878 = vmatprep.subr.mxu0 0.0
    %879 = vmatpush1.msra.mxu0 %v851
    %880 = vmatprep.subr.mxu0 0.0
    %881 = vmatpush1.msra.mxu0 %v850
    %882 = vmatprep.subr.mxu0 0.0
    %883 = vmatpush1.msra.mxu0 %v849
    %884 = vmatprep.subr.mxu0 0.0
    %885 = vmatpush1.msra.mxu0 %v848
    %886 = vmatprep.subr.mxu0 0.0
    %887 = vmatpush1.msra.mxu0 %v847
    %888 = vmatprep.subr.mxu0 0.0
    %889 = vmatpush2.msra.mxu0 0.0
    %890 = vmatprep.subr.mxu0 0.0
    %891 = vmatpush2.msra.mxu0 0.0
    %892 = vmatprep.subr.mxu0 0.0
    %893 = vmatpush2.msra.mxu0 0.0
    %894 = vmatprep.subr.mxu0 0.0
    %895 = vmatpush2.msra.mxu0 0.0
    %896 = vmatprep.subr.mxu0 0.0
    %897 = vmatpush2.msra.mxu0 0.0
    %898 = vmatprep.subr.mxu0 0.0
    %899 = vmatpush2.msra.mxu0 0.0
    %900 = vmatprep.subr.mxu0 0.0
    %901 = vmatpush2.msra.mxu0 0.0
    %902 = vmatprep.subr.mxu0 0.0
    %903 = vmatpush2.msra.mxu0 0.0
    %904 = vmatprep.subr.mxu0 0.0
    %905 = vmatpush2.msra.mxu0 0.0
    %906 = vmatprep.subr.mxu0 0.0
    %907 = vmatpush2.msra.mxu0 0.0
    %908 = vmatprep.subr.mxu0 0.0
    %909 = vmatpush2.msra.mxu0 0.0
    %910 = vmatprep.subr.mxu0 0.0
    %911 = vmatpush2.msra.mxu0 0.0
    %912 = vmatprep.subr.mxu0 0.0
    %913 = vmatpush2.msra.mxu0 0.0
    %914 = vmatprep.subr.mxu0 0.0
    %915 = vmatpush2.msra.mxu0 0.0
    %916 = vmatprep.subr.mxu0 0.0
    %917 = vmatpush2.msra.mxu0 0.0
    %918 = vmatprep.subr.mxu0 0.0
    %919 = vmatpush2.msra.mxu0 0.0
    %920 = vmatprep.mubr.f32.mxu0 0.0
    %921 = vmatmul.mubr.f32.gmra.mxu0 %v854
    %v922 = vpop.f32.mrf.mxu0
    %v923 = vadd.f32 0.0, %v922
    %v924 = vpop.f32.mrf.mxu0
    %925 = vdwg.mxu0
    %v927 = vsel %vm852, %v834, 0
    %929 = vmatprep.subr.mxu0 0.0
    %930 = vmatpush1.msra.mxu0 0.0
    %931 = vmatprep.subr.mxu0 0.0
    %932 = vmatpush1.msra.mxu0 0.0
    %933 = vmatprep.subr.mxu0 0.0
    %934 = vmatpush1.msra.mxu0 0.0
    %935 = vmatprep.subr.mxu0 0.0
    %936 = vmatpush1.msra.mxu0 0.0
    %937 = vmatprep.subr.mxu0 0.0
    %938 = vmatpush1.msra.mxu0 0.0
    %939 = vmatprep.subr.mxu0 0.0
    %940 = vmatpush1.msra.mxu0 0.0
    %941 = vmatprep.subr.mxu0 0.0
    %942 = vmatpush1.msra.mxu0 0.0
    %943 = vmatprep.subr.mxu0 0.0
    %944 = vmatpush1.msra.mxu0 0.0
    %945 = vmatprep.subr.mxu0 0.0
    %946 = vmatpush1.msra.mxu0 0.0
    %947 = vmatprep.subr.mxu0 0.0
    %948 = vmatpush1.msra.mxu0 0.0
    %949 = vmatprep.subr.mxu0 0.0
    %950 = vmatpush1.msra.mxu0 0.0
    %951 = vmatprep.subr.mxu0 0.0
    %952 = vmatpush1.msra.mxu0 %v839
    %953 = vmatprep.subr.mxu0 0.0
    %954 = vmatpush1.msra.mxu0 %v838
    %955 = vmatprep.subr.mxu0 0.0
    %956 = vmatpush1.msra.mxu0 %v837
    %957 = vmatprep.subr.mxu0 0.0
    %958 = vmatpush1.msra.mxu0 %v836
    %959 = vmatprep.subr.mxu0 0.0
    %960 = vmatpush1.msra.mxu0 %v835
    %961 = vmatprep.subr.mxu0 0.0
    %962 = vmatpush2.msra.mxu0 0.0
    %963 = vmatprep.subr.mxu0 0.0
    %964 = vmatpush2.msra.mxu0 0.0
    %965 = vmatprep.subr.mxu0 0.0
    %966 = vmatpush2.msra.mxu0 0.0
    %967 = vmatprep.subr.mxu0 0.0
    %968 = vmatpush2.msra.mxu0 0.0
    %969 = vmatprep.subr.mxu0 0.0
    %970 = vmatpush2.msra.mxu0 0.0
    %971 = vmatprep.subr.mxu0 0.0
    %972 = vmatpush2.msra.mxu0 0.0
    %973 = vmatprep.subr.mxu0 0.0
    %974 = vmatpush2.msra.mxu0 0.0
    %975 = vmatprep.subr.mxu0 0.0
    %976 = vmatpush2.msra.mxu0 0.0
    %977 = vmatprep.subr.mxu0 0.0
    %978 = vmatpush2.msra.mxu0 0.0
    %979 = vmatprep.subr.mxu0 0.0
    %980 = vmatpush2.msra.mxu0 0.0
    %981 = vmatprep.subr.mxu0 0.0
    %982 = vmatpush2.msra.mxu0 0.0
    %983 = vmatprep.subr.mxu0 0.0
    %984 = vmatpush2.msra.mxu0 0.0
    %985 = vmatprep.subr.mxu0 0.0
    %986 = vmatpush2.msra.mxu0 0.0
    %987 = vmatprep.subr.mxu0 0.0
    %988 = vmatpush2.msra.mxu0 0.0
    %989 = vmatprep.subr.mxu0 0.0
    %990 = vmatpush2.msra.mxu0 0.0
    %991 = vmatprep.subr.mxu0 0.0
    %992 = vmatpush2.msra.mxu0 0.0
    %993 = vmatprep.mubr.f32.mxu0 0.0
    %994 = vmatmul.mubr.f32.gmra.mxu0 %v927
    %v995 = vpop.f32.mrf.mxu0
    %v996 = vadd.f32 %v923, %v995
    %v997 = vpop.f32.mrf.mxu0
    %998 = vdwg.mxu0
    %v999 = vld [vmem:[%s6] sm:$0x1]
    %v1001 = vlaneseq
    %v1002 = vshrl.u32 %v1001, 7
    %v1003 = vsub.s32 0, %v1002
    %v1004 = vrot.slane %v999, %v1003
    %v1006 = vadd.f32 %v996, %v1004
    %v1007 = vmax.f32 %v1006, 0.0
    %1008 = vst [vmem:[#allocation5] sm:$0x3] %v1007
    // Predicated region
    $region34: #{forward.1} parent=1 // pred_check
      _
    $region35: #{forward.1} parent=1 // pred_check_branch
      %1010 = sbr.rel (0) target = $region37
    $region36: #{forward.1} parent=1 // pred_region
      %s1012 = ssub.s32 32, 32
      %1013 = vsyncadd [#allocation4], %s1012
      %s1015 = sshll.u32 [#allocation5], 4
      %s1016 = int_to_ptr.vmem [resolvable:$true] %s1015
      %1018 = dma.vmem_to_hbm [thread:$0]  %s1016, 32, %s7, [#allocation4]
    $region37: #{forward.1} parent=1 // pred_fallthru
      _
    // Predicated region
    $region38: #{forward.1} parent=1 // pred_check
      _
    $region39: #{forward.1} parent=1 // pred_check_branch
      %1020 = sbr.rel (0) target = $region41
    $region40: #{forward.1} parent=1 // pred_region
      %1021 = dma.done [#allocation4], 32
    $region41: #{forward.1} parent=1 // pred_fallthru
      _
    %1022 = vsyncpa [#allocation3], 1
    %1023 = vsyncpa [#allocation4], 1

</llo_original>
